<compile_context>
chip_gen: v7x
topology: tpu7x:2x2x1
jax: 0.10.0
libtpu: 0.0.40
codegen_flags: <defaults>
</compile_context>

<pallas_src>
import jax
import jax.numpy as jnp
from jax.experimental import pallas as pl
from jax.experimental.pallas import tpu as pltpu


def mlp_kernel(x_ref, w1_ref, b1_ref, w2_ref, b2_ref, w3_ref, b3_ref, o_ref):
    x = x_ref[...]                                   # (TB, 1)

    # layer1: K=1  ->  rank-1 outer product on the VPU (no MXU round-trip)
    h1 = x * w1_ref[...]                             # (TB,1)*(1,64) -> (TB,64)
    h1 = jnp.maximum(h1 + b1_ref[...], 0.0)

    # layer2: (TB,64) @ (64,64) on the MXU, f32 accumulation
    h2 = jnp.dot(h1, w2_ref[...], preferred_element_type=jnp.float32)
    h2 = jnp.maximum(h2 + b2_ref[...], 0.0)

    # layer3: (TB,64) @ (64,128)  (zero-padded to 128 lanes -> unmasked stores)
    out = jnp.dot(h2, w3_ref[...], preferred_element_type=jnp.float32)
    o_ref[...] = (out + b3_ref[...]).astype(o_ref.dtype)


def _round_up(n, m):
    return ((n + m - 1) // m) * m


def mlp_forward(x, params, *, block_b=512):
    w1, b1, w2, b2, w3, b3 = params
    B = x.shape[0]
    out_dim = w3.shape[1]                     # 2
    n_pad = 128                               # lane-dense output width

    # Zero-pad the last layer to 128 output features (outside the kernel,
    # outside the accuracy-sensitive path -> padded columns are exactly 0).
    w3p = jnp.zeros((w3.shape[0], n_pad), w3.dtype).at[:, :out_dim].set(w3)
    b3p = jnp.zeros((1, n_pad), b3.dtype).at[:, :out_dim].set(b3)

    # Batch tiling: blocks of up to `block_b` rows, padded to a multiple of 8
    # (f32 sublane tile).  Small batches become a single full block.
    tb = min(block_b, _round_up(B, 8))
    b_pad = _round_up(B, tb)
    if b_pad != B:
        x = jnp.pad(x, ((0, b_pad - B), (0, 0)))
    grid = (b_pad // tb,)

    # Weights stay resident across the batch grid (constant index maps).
    def resident(a):
        return pl.BlockSpec(a.shape, lambda i, _nd=a.ndim: (0,) * _nd)

    flops = 2 * b_pad * (64 + 64 * 64 + 64 * n_pad)
    bytes_accessed = 4 * (b_pad * 1 + b_pad * n_pad
                          + 64 + 64 + 64 * 64 + 64 + 64 * n_pad + n_pad)
    cost = pl.CostEstimate(flops=flops, transcendentals=0,
                           bytes_accessed=bytes_accessed)

    out = pl.pallas_call(
        mlp_kernel,
        out_shape=jax.ShapeDtypeStruct((b_pad, n_pad), jnp.float32),
        grid=grid,
        in_specs=[
            pl.BlockSpec((tb, 1), lambda i: (i, 0)),      # x, tiled over batch
            resident(w1), resident(b1),
            resident(w2), resident(b2),
            resident(w3p), resident(b3p),
        ],
        out_specs=pl.BlockSpec((tb, n_pad), lambda i: (i, 0)),
        compiler_params=pltpu.CompilerParams(
            dimension_semantics=("parallel",)),
        cost_estimate=cost,
    )(x, w1, b1, w2, b2, w3p, b3p)

    # Un-pad batch and feature dims outside the kernel.
    return out[:B, :out_dim]


def init_params(key):
    """Deterministic init mimicking PyTorch nn.Linear defaults
    (U[-1/sqrt(fan_in), 1/sqrt(fan_in)]); weights stored (in, out)."""
    def linear(key, fan_in, fan_out):
        kw, kb = jax.random.split(key)
        bound = 1.0 / jnp.sqrt(fan_in)
        w = jax.random.uniform(kw, (fan_in, fan_out), jnp.float32, -bound, bound)
        b = jax.random.uniform(kb, (1, fan_out), jnp.float32, -bound, bound)
        return w, b

    k1, k2, k3 = jax.random.split(key, 3)
    w1, b1 = linear(k1, 1, 64)
    w2, b2 = linear(k2, 64, 64)
    w3, b3 = linear(k3, 64, 2)
    return (w1, b1, w2, b2, w3, b3)


if __name__ == "__main__":
    key = jax.random.PRNGKey(0)
    pkey, xkey = jax.random.split(key)

    params = init_params(pkey)
    B = 8
    x = jax.random.normal(xkey, (B, 1), jnp.float32)   # (batch, 1) input

    out = mlp_forward(x, params)
    out = jax.block_until_ready(out)

    # Reference check against plain JAX (f32 end-to-end -> exact-ish match).
    w1, b1, w2, b2, w3, b3 = params
    ref = jnp.maximum(x @ w1 + b1, 0.0)
    ref = jnp.maximum(ref @ w2 + b2, 0.0)
    ref = ref @ w3 + b3
    assert out.shape == (B, 2)
    assert jnp.allclose(out, ref, atol=1e-5, rtol=1e-5)

    print("KERNEL_OK")
</pallas_src>

<mosaic_0001>
module attributes {stable_mosaic.version = 11 : i64} {
  func.func @mlp_kernel(%arg0: i32, %arg1: memref<8x1xf32, #tpu.memory_space<vmem>>, %arg2: memref<1x64xf32, #tpu.memory_space<vmem>>, %arg3: memref<1x64xf32, #tpu.memory_space<vmem>>, %arg4: memref<64x64xf32, #tpu.memory_space<vmem>>, %arg5: memref<1x64xf32, #tpu.memory_space<vmem>>, %arg6: memref<64x128xf32, #tpu.memory_space<vmem>>, %arg7: memref<1x128xf32, #tpu.memory_space<vmem>>, %arg8: memref<8x128xf32, #tpu.memory_space<vmem>>) attributes {dimension_semantics = [#tpu.dimension_semantics<parallel>], iteration_bounds = array<i64: 1>, scalar_prefetch = 0 : i64, scratch_operands = 0 : i64, tpu.core_type = #tpu.core_type<tc>, window_params = [{transform_indices = @transform_0, window_bounds = array<i64: 8, 1>}, {pipeline_mode = #tpu.pipeline_mode<synchronous>, transform_indices = @transform_1, window_bounds = array<i64: 1, 64>}, {pipeline_mode = #tpu.pipeline_mode<synchronous>, transform_indices = @transform_2, window_bounds = array<i64: 1, 64>}, {pipeline_mode = #tpu.pipeline_mode<synchronous>, transform_indices = @transform_3, window_bounds = array<i64: 64, 64>}, {pipeline_mode = #tpu.pipeline_mode<synchronous>, transform_indices = @transform_4, window_bounds = array<i64: 1, 64>}, {pipeline_mode = #tpu.pipeline_mode<synchronous>, transform_indices = @transform_5, window_bounds = array<i64: 64, 128>}, {pipeline_mode = #tpu.pipeline_mode<synchronous>, transform_indices = @transform_6, window_bounds = array<i64: 1, 128>}, {transform_indices = @transform_7, window_bounds = array<i64: 8, 128>}]} {
    %c0 = arith.constant 0 : index
    %c0_0 = arith.constant 0 : index
    %0 = vector.load %arg1[%c0, %c0_0] : memref<8x1xf32, #tpu.memory_space<vmem>>, vector<8x1xf32>
    %c0_1 = arith.constant 0 : index
    %c0_2 = arith.constant 0 : index
    %1 = vector.load %arg2[%c0_1, %c0_2] : memref<1x64xf32, #tpu.memory_space<vmem>>, vector<1x64xf32>
    %2 = vector.broadcast %0 : vector<8x1xf32> to vector<8x64xf32>
    %3 = vector.broadcast %1 : vector<1x64xf32> to vector<8x64xf32>
    %4 = arith.mulf %2, %3 : vector<8x64xf32>
    %c0_3 = arith.constant 0 : index
    %c0_4 = arith.constant 0 : index
    %5 = vector.load %arg3[%c0_3, %c0_4] : memref<1x64xf32, #tpu.memory_space<vmem>>, vector<1x64xf32>
    %6 = vector.broadcast %5 : vector<1x64xf32> to vector<8x64xf32>
    %7 = arith.addf %4, %6 : vector<8x64xf32>
    %cst = arith.constant 0.000000e+00 : f32
    %8 = vector.broadcast %cst : f32 to vector<8x64xf32>
    %9 = arith.maximumf %7, %8 : vector<8x64xf32>
    %c0_5 = arith.constant 0 : index
    %c0_6 = arith.constant 0 : index
    %10 = vector.load %arg4[%c0_5, %c0_6] : memref<64x64xf32, #tpu.memory_space<vmem>>, vector<64x64xf32>
    %cst_7 = arith.constant dense<0.000000e+00> : vector<8x64xf32>
    %11 = tpu.matmul %9, %10, %cst_7 {dimension_numbers = #tpu.dot_dimension_numbers<[1], [0], [0], [1], [0, 0, 1, 1], [], []>} : vector<8x64xf32>, vector<64x64xf32>, vector<8x64xf32> -> vector<8x64xf32>
    %c0_8 = arith.constant 0 : index
    %c0_9 = arith.constant 0 : index
    %12 = vector.load %arg5[%c0_8, %c0_9] : memref<1x64xf32, #tpu.memory_space<vmem>>, vector<1x64xf32>
    %13 = vector.broadcast %12 : vector<1x64xf32> to vector<8x64xf32>
    %14 = arith.addf %11, %13 : vector<8x64xf32>
    %cst_10 = arith.constant 0.000000e+00 : f32
    %15 = vector.broadcast %cst_10 : f32 to vector<8x64xf32>
    %16 = arith.maximumf %14, %15 : vector<8x64xf32>
    %c0_11 = arith.constant 0 : index
    %c0_12 = arith.constant 0 : index
    %17 = vector.load %arg6[%c0_11, %c0_12] : memref<64x128xf32, #tpu.memory_space<vmem>>, vector<64x128xf32>
    %cst_13 = arith.constant dense<0.000000e+00> : vector<8x128xf32>
    %18 = tpu.matmul %16, %17, %cst_13 {dimension_numbers = #tpu.dot_dimension_numbers<[1], [0], [0], [1], [0, 0, 1, 1], [], []>} : vector<8x64xf32>, vector<64x128xf32>, vector<8x128xf32> -> vector<8x128xf32>
    %c0_14 = arith.constant 0 : index
    %c0_15 = arith.constant 0 : index
    %19 = vector.load %arg7[%c0_14, %c0_15] : memref<1x128xf32, #tpu.memory_space<vmem>>, vector<1x128xf32>
    %20 = vector.broadcast %19 : vector<1x128xf32> to vector<8x128xf32>
    %21 = arith.addf %18, %20 : vector<8x128xf32>
    %c0_16 = arith.constant 0 : index
    %c0_17 = arith.constant 0 : index
    %22 = vector.load %arg8[%c0_16, %c0_17] : memref<8x128xf32, #tpu.memory_space<vmem>>, vector<8x128xf32>
    tpu.vector_store %arg8[%c0_16, %c0_17], %21 {strides = array<i32>} : memref<8x128xf32, #tpu.memory_space<vmem>>, vector<8x128xf32>,
    return
  }
  func.func @transform_0(%arg0: i32) -> (i32, i32) {
    %c0_i32 = arith.constant 0 : i32
    %c0_i32_0 = arith.constant 0 : i32
    return %arg0, %c0_i32 : i32, i32
  }
  func.func @transform_1(%arg0: i32) -> (i32, i32) {
    %c0_i32 = arith.constant 0 : i32
    %c0_i32_0 = arith.constant 0 : i32
    %c0_i32_1 = arith.constant 0 : i32
    return %c0_i32, %c0_i32_0 : i32, i32
  }
  func.func @transform_2(%arg0: i32) -> (i32, i32) {
    %c0_i32 = arith.constant 0 : i32
    %c0_i32_0 = arith.constant 0 : i32
    %c0_i32_1 = arith.constant 0 : i32
    return %c0_i32, %c0_i32_0 : i32, i32
  }
  func.func @transform_3(%arg0: i32) -> (i32, i32) {
    %c0_i32 = arith.constant 0 : i32
    %c0_i32_0 = arith.constant 0 : i32
    %c0_i32_1 = arith.constant 0 : i32
    return %c0_i32, %c0_i32_0 : i32, i32
  }
  func.func @transform_4(%arg0: i32) -> (i32, i32) {
    %c0_i32 = arith.constant 0 : i32
    %c0_i32_0 = arith.constant 0 : i32
    %c0_i32_1 = arith.constant 0 : i32
    return %c0_i32, %c0_i32_0 : i32, i32
  }
  func.func @transform_5(%arg0: i32) -> (i32, i32) {
    %c0_i32 = arith.constant 0 : i32
    %c0_i32_0 = arith.constant 0 : i32
    %c0_i32_1 = arith.constant 0 : i32
    return %c0_i32, %c0_i32_0 : i32, i32
  }
  func.func @transform_6(%arg0: i32) -> (i32, i32) {
    %c0_i32 = arith.constant 0 : i32
    %c0_i32_0 = arith.constant 0 : i32
    %c0_i32_1 = arith.constant 0 : i32
    return %c0_i32, %c0_i32_0 : i32, i32
  }
  func.func @transform_7(%arg0: i32) -> (i32, i32) {
    %c0_i32 = arith.constant 0 : i32
    %c0_i32_0 = arith.constant 0 : i32
    return %arg0, %c0_i32 : i32, i32
  }
}

</mosaic_0001>

<llo_original>
// kernel: tpu_custom_call.1
$region0: #{tpu_custom_call.1}
  #allocation0 [shape = 'u32[]', space=smem, size = 0x4, offset = 0x4, fixed_abs, tag = 'smem constant byte address 0x4 - core index']
  #allocation1 [shape = 'u32[144,128]{1,0:T(1,128)}', space=vmem, size = 0x12000, scoped, tag = 'internal scratch']
  %s0 = inlined_call_operand.vmem [shape: f32[8,1], index: 0, kind: input, shape index: {}]
  %s1 = inlined_call_operand.vmem [shape: f32[1,64], index: 1, kind: input, shape index: {}]
  %s2 = inlined_call_operand.vmem [shape: f32[1,64], index: 2, kind: input, shape index: {}]
  %s3 = inlined_call_operand.hbm [shape: f32[64,64], index: 3, kind: input, shape index: {}]
  %s4 = inlined_call_operand.vmem [shape: f32[1,64], index: 4, kind: input, shape index: {}]
  %s5 = inlined_call_operand.hbm [shape: f32[64,128], index: 5, kind: input, shape index: {}]
  %s6 = inlined_call_operand.vmem [shape: f32[1,128], index: 6, kind: input, shape index: {}]
  %s7 = inlined_call_operand.hbm [shape: f32[8,128], index: 7, kind: output, shape index: {}]
  %s8 = sld [smem:[#allocation0]]
  $region46: #{tpu_custom_call.1} parent=0
    _
  %s10 = ssub.s32 1, %s8
  %s11 = scalar_select 0, %s10, %s8
  $region1: #{tpu_custom_call.1} parent=0
    #allocation2 [shape = 'u8[32768]{0}', space=vmem, size = 0x8000, scoped, tag = 'input window, operand 3, single buffered']
    #allocation3 [shape = 's32[1]{0}', space=sflag, size = 0x4, scoped, tag = 'scoped memory for tpu_custom_call.1']
    #allocation4 [shape = 's32[1]{0}', space=sflag, size = 0x4, scoped, tag = 'scoped memory for tpu_custom_call.1']
    #allocation5 [shape = 'u8[32768]{0}', space=vmem, size = 0x8000, scoped, tag = 'input window, operand 5, single buffered']
    #allocation6 [shape = 's32[1]{0}', space=sflag, size = 0x4, scoped, tag = 'scoped memory for tpu_custom_call.1']
    #allocation7 [shape = 'u8[4096]{0}', space=vmem, size = 0x1000, scoped, tag = 'output window, operand 0, single buffered']
    %12 = vsyncpa [#allocation3], 0
    %13 = vsyncpa [#allocation6], 0
    %14 = vsyncpa [#allocation4], 0
    // Predicated region
    $region2: #{tpu_custom_call.1} parent=1 // pred_check
      _
    $region3: #{tpu_custom_call.1} parent=1 // pred_check_branch
      %16 = sbr.rel (0) target = $region5
    $region4: #{tpu_custom_call.1} parent=1 // pred_region
      _
    $region5: #{tpu_custom_call.1} parent=1 // pred_fallthru
      _
    // Predicated region
    $region6: #{tpu_custom_call.1} parent=1 // pred_check
      _
    $region7: #{tpu_custom_call.1} parent=1 // pred_check_branch
      %18 = sbr.rel (0) target = $region9
    $region8: #{tpu_custom_call.1} parent=1 // pred_region
      _
    $region9: #{tpu_custom_call.1} parent=1 // pred_fallthru
      _
    // Predicated region
    $region10: #{tpu_custom_call.1} parent=1 // pred_check
      _
    $region11: #{tpu_custom_call.1} parent=1 // pred_check_branch
      %20 = sbr.rel (0) target = $region13
    $region12: #{tpu_custom_call.1} parent=1 // pred_region
      _
    $region13: #{tpu_custom_call.1} parent=1 // pred_fallthru
      _
    // Predicated region
    $region14: #{tpu_custom_call.1} parent=1 // pred_check
      _
    $region15: #{tpu_custom_call.1} parent=1 // pred_check_branch
      %22 = sbr.rel (0) target = $region17
    $region16: #{tpu_custom_call.1} parent=1 // pred_region
      %s24 = ssub.s32 1024, 1024
      %25 = vsyncadd [#allocation3], %s24
      %s26 = sshll.u32 [#allocation2], 4
      %s27 = int_to_ptr.vmem [resolvable:$true] %s26
      %32 = dma.hbm_to_vmem [thread:$0]  %s3, 1024, %s27, [#allocation3], 128, 128, 8
    $region17: #{tpu_custom_call.1} parent=1 // pred_fallthru
      _
    // Predicated region
    $region18: #{tpu_custom_call.1} parent=1 // pred_check
      _
    $region19: #{tpu_custom_call.1} parent=1 // pred_check_branch
      %34 = sbr.rel (0) target = $region21
    $region20: #{tpu_custom_call.1} parent=1 // pred_region
      _
    $region21: #{tpu_custom_call.1} parent=1 // pred_fallthru
      _
    // Predicated region
    $region22: #{tpu_custom_call.1} parent=1 // pred_check
      _
    $region23: #{tpu_custom_call.1} parent=1 // pred_check_branch
      %36 = sbr.rel (0) target = $region25
    $region24: #{tpu_custom_call.1} parent=1 // pred_region
      %s38 = ssub.s32 1024, 1024
      %39 = vsyncadd [#allocation6], %s38
      %s40 = sshll.u32 [#allocation5], 4
      %s41 = int_to_ptr.vmem [resolvable:$true] %s40
      %46 = dma.hbm_to_vmem [thread:$0]  %s5, 1024, %s41, [#allocation6], 128, 128, 8
    $region25: #{tpu_custom_call.1} parent=1 // pred_fallthru
      _
    // Predicated region
    $region26: #{tpu_custom_call.1} parent=1 // pred_check
      _
    $region27: #{tpu_custom_call.1} parent=1 // pred_check_branch
      %48 = sbr.rel (0) target = $region29
    $region28: #{tpu_custom_call.1} parent=1 // pred_region
      _
    $region29: #{tpu_custom_call.1} parent=1 // pred_fallthru
      _
    // Predicated region
    $region30: #{tpu_custom_call.1} parent=1 // pred_check
      _
    $region31: #{tpu_custom_call.1} parent=1 // pred_check_branch
      %50 = sbr.rel (0) target = $region33
    $region32: #{tpu_custom_call.1} parent=1 // pred_region
      %51 = dma.done [#allocation3], 1024
    $region33: #{tpu_custom_call.1} parent=1 // pred_fallthru
      _
    // Predicated region
    $region34: #{tpu_custom_call.1} parent=1 // pred_check
      _
    $region35: #{tpu_custom_call.1} parent=1 // pred_check_branch
      %53 = sbr.rel (0) target = $region37
    $region36: #{tpu_custom_call.1} parent=1 // pred_region
      %54 = dma.done [#allocation6], 1024
    $region37: #{tpu_custom_call.1} parent=1 // pred_fallthru
      _
    %v55 = vld [vmem:[%s0] sm:$0xff]
    %v56 = vld [vmem:[%s1] sm:$0x1]
    %58 = vset.pattern.permute.xlu0 0
    %59 = vperm.xlu0 %58, %v55
    %v60 = vpop.permute.xlu0 %59
    %v63 = vlaneseq
    %v64 = vshrl.u32 %v63, 7
    %v65 = vsub.s32 0, %v64
    %v66 = vrot.slane %v56, %v65
    %v68 = vmul.f32 %v60, %v66
    %v69 = vld [vmem:[%s2] sm:$0x1]
    %v71 = vlaneseq
    %v72 = vshrl.u32 %v71, 7
    %v73 = vsub.s32 0, %v72
    %v74 = vrot.slane %v69, %v73
    %v76 = vadd.f32 %v68, %v74
    %v77 = vmax.f32 %v76, 0.0
    %v78 = vld [vmem:[#allocation2] sm:$0xff]
    %v79 = vld [vmem:[#allocation2 + $0x8] sm:$0xff]
    %v80 = vld [vmem:[#allocation2 + $0x10] sm:$0xff]
    %v81 = vld [vmem:[#allocation2 + $0x18] sm:$0xff]
    %v82 = vld [vmem:[#allocation2 + $0x20] sm:$0xff]
    %v83 = vld [vmem:[#allocation2 + $0x28] sm:$0xff]
    %v84 = vld [vmem:[#allocation2 + $0x30] sm:$0xff]
    %v85 = vld [vmem:[#allocation2 + $0x38] sm:$0xff]
    %v86 = vld [vmem:[%s4] sm:$0x1]
    %v88 = vlaneseq
    %v89 = vshrl.u32 %v88, 7
    %v90 = vsub.s32 0, %v89
    %v91 = vrot.slane %v86, %v90
    %vm93 = vcmask 523264
    %v95 = vsel %vm93, %v77, 0
    %97 = vmatprep.subr.mxu0 0.0
    %98 = vmatpush1.msra.mxu0 %v78
    %99 = vmatprep.subr.mxu0 0.0
    %100 = vmatpush1.msra.mxu0 %v79
    %101 = vmatprep.subr.mxu0 0.0
    %102 = vmatpush1.msra.mxu0 %v80
    %103 = vmatprep.subr.mxu0 0.0
    %104 = vmatpush1.msra.mxu0 %v81
    %105 = vmatprep.subr.mxu0 0.0
    %106 = vmatpush1.msra.mxu0 %v82
    %107 = vmatprep.subr.mxu0 0.0
    %108 = vmatpush1.msra.mxu0 %v83
    %109 = vmatprep.subr.mxu0 0.0
    %110 = vmatpush1.msra.mxu0 %v84
    %111 = vmatprep.subr.mxu0 0.0
    %112 = vmatpush1.msra.mxu0 %v85
    %113 = vmatprep.subr.mxu0 0.0
    %114 = vmatpush1.msra.mxu0 0.0
    %115 = vmatprep.subr.mxu0 0.0
    %116 = vmatpush1.msra.mxu0 0.0
    %117 = vmatprep.subr.mxu0 0.0
    %118 = vmatpush1.msra.mxu0 0.0
    %119 = vmatprep.subr.mxu0 0.0
    %120 = vmatpush1.msra.mxu0 0.0
    %121 = vmatprep.subr.mxu0 0.0
    %122 = vmatpush1.msra.mxu0 0.0
    %123 = vmatprep.subr.mxu0 0.0
    %124 = vmatpush1.msra.mxu0 0.0
    %125 = vmatprep.subr.mxu0 0.0
    %126 = vmatpush1.msra.mxu0 0.0
    %127 = vmatprep.subr.mxu0 0.0
    %128 = vmatpush1.msra.mxu0 0.0
    %129 = vmatprep.subr.mxu0 0.0
    %130 = vmatpush1.msra.mxu0 0.0
    %131 = vmatprep.subr.mxu0 0.0
    %132 = vmatpush1.msra.mxu0 0.0
    %133 = vmatprep.subr.mxu0 0.0
    %134 = vmatpush1.msra.mxu0 0.0
    %135 = vmatprep.subr.mxu0 0.0
    %136 = vmatpush1.msra.mxu0 0.0
    %137 = vmatprep.subr.mxu0 0.0
    %138 = vmatpush1.msra.mxu0 0.0
    %139 = vmatprep.subr.mxu0 0.0
    %140 = vmatpush1.msra.mxu0 0.0
    %141 = vmatprep.subr.mxu0 0.0
    %142 = vmatpush1.msra.mxu0 0.0
    %143 = vmatprep.subr.mxu0 0.0
    %144 = vmatpush1.msra.mxu0 0.0
    %145 = vmatprep.subr.mxu0 0.0
    %146 = vmatpush1.msra.mxu0 0.0
    %147 = vmatprep.subr.mxu0 0.0
    %148 = vmatpush1.msra.mxu0 0.0
    %149 = vmatprep.subr.mxu0 0.0
    %150 = vmatpush1.msra.mxu0 0.0
    %151 = vmatprep.subr.mxu0 0.0
    %152 = vmatpush1.msra.mxu0 0.0
    %153 = vmatprep.subr.mxu0 0.0
    %154 = vmatpush1.msra.mxu0 0.0
    %155 = vmatprep.subr.mxu0 0.0
    %156 = vmatpush1.msra.mxu0 0.0
    %157 = vmatprep.subr.mxu0 0.0
    %158 = vmatpush1.msra.mxu0 0.0
    %159 = vmatprep.subr.mxu0 0.0
    %160 = vmatpush1.msra.mxu0 0.0
    %161 = vmatprep.mubr.f32.mxu0 0.0
    %162 = vmatmul.mubr.f32.gmra.mrb[0].mxu0 %v95
    %v163 = vpop.f32.mrb[0].mxu0
    %v164 = vadd.f32 %v91, %v163
    %v165 = vpop.f32.mrb[0].mxu0
    %166 = vdwg.mxu0
    %v167 = vmax.f32 %v164, 0.0
    %v168 = vld [vmem:[#allocation5] sm:$0xff]
    %v169 = vld [vmem:[#allocation5 + $0x8] sm:$0xff]
    %v170 = vld [vmem:[#allocation5 + $0x10] sm:$0xff]
    %v171 = vld [vmem:[#allocation5 + $0x18] sm:$0xff]
    %v172 = vld [vmem:[#allocation5 + $0x20] sm:$0xff]
    %v173 = vld [vmem:[#allocation5 + $0x28] sm:$0xff]
    %v174 = vld [vmem:[#allocation5 + $0x30] sm:$0xff]
    %v175 = vld [vmem:[#allocation5 + $0x38] sm:$0xff]
    %v176 = vld [vmem:[%s6] sm:$0x1]
    %v178 = vlaneseq
    %v179 = vshrl.u32 %v178, 7
    %v180 = vsub.s32 0, %v179
    %v181 = vrot.slane %v176, %v180
    %v184 = vsel %vm93, %v167, 0
    %186 = vmatprep.subr.mxu0 0.0
    %187 = vmatpush1.msra.mxu0 %v168
    %188 = vmatprep.subr.mxu0 0.0
    %189 = vmatpush1.msra.mxu0 %v169
    %190 = vmatprep.subr.mxu0 0.0
    %191 = vmatpush1.msra.mxu0 %v170
    %192 = vmatprep.subr.mxu0 0.0
    %193 = vmatpush1.msra.mxu0 %v171
    %194 = vmatprep.subr.mxu0 0.0
    %195 = vmatpush1.msra.mxu0 %v172
    %196 = vmatprep.subr.mxu0 0.0
    %197 = vmatpush1.msra.mxu0 %v173
    %198 = vmatprep.subr.mxu0 0.0
    %199 = vmatpush1.msra.mxu0 %v174
    %200 = vmatprep.subr.mxu0 0.0
    %201 = vmatpush1.msra.mxu0 %v175
    %202 = vmatprep.subr.mxu0 0.0
    %203 = vmatpush1.msra.mxu0 0.0
    %204 = vmatprep.subr.mxu0 0.0
    %205 = vmatpush1.msra.mxu0 0.0
    %206 = vmatprep.subr.mxu0 0.0
    %207 = vmatpush1.msra.mxu0 0.0
    %208 = vmatprep.subr.mxu0 0.0
    %209 = vmatpush1.msra.mxu0 0.0
    %210 = vmatprep.subr.mxu0 0.0
    %211 = vmatpush1.msra.mxu0 0.0
    %212 = vmatprep.subr.mxu0 0.0
    %213 = vmatpush1.msra.mxu0 0.0
    %214 = vmatprep.subr.mxu0 0.0
    %215 = vmatpush1.msra.mxu0 0.0
    %216 = vmatprep.subr.mxu0 0.0
    %217 = vmatpush1.msra.mxu0 0.0
    %218 = vmatprep.subr.mxu0 0.0
    %219 = vmatpush1.msra.mxu0 0.0
    %220 = vmatprep.subr.mxu0 0.0
    %221 = vmatpush1.msra.mxu0 0.0
    %222 = vmatprep.subr.mxu0 0.0
    %223 = vmatpush1.msra.mxu0 0.0
    %224 = vmatprep.subr.mxu0 0.0
    %225 = vmatpush1.msra.mxu0 0.0
    %226 = vmatprep.subr.mxu0 0.0
    %227 = vmatpush1.msra.mxu0 0.0
    %228 = vmatprep.subr.mxu0 0.0
    %229 = vmatpush1.msra.mxu0 0.0
    %230 = vmatprep.subr.mxu0 0.0
    %231 = vmatpush1.msra.mxu0 0.0
    %232 = vmatprep.subr.mxu0 0.0
    %233 = vmatpush1.msra.mxu0 0.0
    %234 = vmatprep.subr.mxu0 0.0
    %235 = vmatpush1.msra.mxu0 0.0
    %236 = vmatprep.subr.mxu0 0.0
    %237 = vmatpush1.msra.mxu0 0.0
    %238 = vmatprep.subr.mxu0 0.0
    %239 = vmatpush1.msra.mxu0 0.0
    %240 = vmatprep.subr.mxu0 0.0
    %241 = vmatpush1.msra.mxu0 0.0
    %242 = vmatprep.subr.mxu0 0.0
    %243 = vmatpush1.msra.mxu0 0.0
    %244 = vmatprep.subr.mxu0 0.0
    %245 = vmatpush1.msra.mxu0 0.0
    %246 = vmatprep.subr.mxu0 0.0
    %247 = vmatpush1.msra.mxu0 0.0
    %248 = vmatprep.subr.mxu0 0.0
    %249 = vmatpush1.msra.mxu0 0.0
    %250 = vmatprep.mubr.f32.mxu0 0.0
    %251 = vmatmul.mubr.f32.gmra.mrb[0].mxu0 %v184
    %v252 = vpop.f32.mrb[0].mxu0
    %v253 = vadd.f32 %v181, %v252
    %v254 = vpop.f32.mrb[0].mxu0
    %255 = vdwg.mxu0
    %256 = vst [vmem:[#allocation7] sm:$0xff] %v253
    // Predicated region
    $region38: #{tpu_custom_call.1} parent=1 // pred_check
      _
    $region39: #{tpu_custom_call.1} parent=1 // pred_check_branch
      %258 = sbr.rel (0) target = $region41
    $region40: #{tpu_custom_call.1} parent=1 // pred_region
      %s260 = ssub.s32 128, 128
      %261 = vsyncadd [#allocation4], %s260
      %s263 = sshll.u32 [#allocation7], 4
      %s264 = int_to_ptr.vmem [resolvable:$true] %s263
      %266 = dma.vmem_to_hbm [thread:$0]  %s264, 128, %s7, [#allocation4]
    $region41: #{tpu_custom_call.1} parent=1 // pred_fallthru
      _
    // Predicated region
    $region42: #{tpu_custom_call.1} parent=1 // pred_check
      _
    $region43: #{tpu_custom_call.1} parent=1 // pred_check_branch
      %268 = sbr.rel (0) target = $region45
    $region44: #{tpu_custom_call.1} parent=1 // pred_region
      %269 = dma.done [#allocation4], 128
    $region45: #{tpu_custom_call.1} parent=1 // pred_fallthru
      _
    %270 = vsyncpa [#allocation3], 1
    %271 = vsyncpa [#allocation6], 1
    %272 = vsyncpa [#allocation4], 1

</llo_original>
